<compile_context>
chip_gen: v7x
topology: tpu7x:2x2x1
jax: 0.10.0
libtpu: 0.0.40
codegen_flags: <defaults>
</compile_context>

<pallas_src>
import math

import jax
import jax.numpy as jnp
from jax.experimental import pallas as pl
from jax.experimental.pallas import tpu as pltpu


def han_kernel(q_ref, k_ref, m_ref, w_ref, p_ref, nq_ref, nk_ref, attn_ref):
    """One grid step: a (Bblk, L, H) slice of the batch, everything resident in VMEM.

    w_ref: (H, 2H)  packed [W_obs^T | W_mat^T]  (pre-transposed to (in, out))
    p_ref: (4, H)   rows: b_obs, b_mat, gamma, beta
    """
    Bblk, Lq, H = q_ref.shape
    Lk = k_ref.shape[1]

    q = q_ref[...]                                    # (Bblk, Lq, H) f32
    k = k_ref[...]                                    # (Bblk, Lk, H) f32

    # --- ScaledDotProductAttention (batched over the block in one step) ---
    score = jnp.einsum('bqd,bkd->bqk', q, k,
                       preferred_element_type=jnp.float32) * (1.0 / math.sqrt(H))
    # i8 mask compared directly (no f32 cast / materialization); large finite
    # negative instead of -inf keeps fully-masked rows NaN-free.
    score = jnp.where(m_ref[...] != 0, score, -1e30)
    score_max = jnp.max(score, axis=-1, keepdims=True)
    p = jnp.exp(score - score_max)
    denom = jnp.sum(p, axis=-1, keepdims=True)
    attn = p / denom                                  # exact: rows sum to 1
    attn_ref[...] = attn.astype(attn_ref.dtype)

    context = jnp.einsum('bqk,bkd->bqd', attn, k,
                         preferred_element_type=jnp.float32)   # (Bblk, Lq, H)

    # --- Fused Linear(observer) + Linear(matrix): one MXU contraction ---
    Mq = Bblk * Lq
    Mk = Bblk * Lk
    x = jnp.concatenate([context.reshape(Mq, H), k.reshape(Mk, H)], axis=0)  # (Mq+Mk, H)
    y = jnp.dot(x, w_ref[...], preferred_element_type=jnp.float32)           # (Mq+Mk, 2H)

    b_obs = p_ref[0:1, :]                             # (1, H) static slices, free
    b_mat = p_ref[1:2, :]
    gamma = p_ref[2:3, :]
    beta = p_ref[3:4, :]

    def relu_ln(z):
        z = jnp.maximum(z, 0.0)                       # ReLU
        mu = jnp.mean(z, axis=-1, keepdims=True)      # LayerNorm over H
        var = jnp.mean((z - mu) ** 2, axis=-1, keepdims=True)
        return (z - mu) * jax.lax.rsqrt(var + 1e-5) * gamma + beta

    nq = relu_ln(y[:Mq, :H] + b_obs)                  # observer path
    nk = relu_ln(y[Mq:, H:] + b_mat)                  # matrix path

    nq_ref[...] = nq.reshape(Bblk, Lq, H).astype(nq_ref.dtype)
    nk_ref[...] = nk.reshape(Bblk, Lk, H).astype(nk_ref.dtype)


def han_forward(query, key, attention_mask,
                w_obs, b_obs, w_mat, b_mat, gamma, beta,
                *, batch_blocks=1):
    B, Lq, H = query.shape
    Lk = key.shape[1]
    assert B % batch_blocks == 0
    bblk = B // batch_blocks

    # host-side layout prep (cheap one-time XLA ops)
    mask_i8 = attention_mask.astype(jnp.int8)                   # 4x less mask DMA
    w_packed = jnp.concatenate([w_obs.T, w_mat.T], axis=1)      # (H, 2H), (in, out)
    p_packed = jnp.stack([b_obs, b_mat, gamma, beta], axis=0)   # (4, H)

    out_shape = (
        jax.ShapeDtypeStruct((B, Lq, H), jnp.float32),
        jax.ShapeDtypeStruct((B, Lk, H), jnp.float32),
        jax.ShapeDtypeStruct((B, Lq, Lk), jnp.float32),
    )

    # Explicit scoped-VMEM budget (default is only 16 MiB on v5e, 32 MiB on v6e/v7x);
    # generous floor, capped well under v7x's 64 MiB physical VMEM.
    operand_bytes = sum(int(a.size) * a.dtype.itemsize
                        for a in (query, key, mask_i8, w_packed, p_packed))
    out_bytes = sum(math.prod(s.shape) * s.dtype.itemsize for s in out_shape)
    vmem_limit = min(64 << 20, max(16 << 20, 4 * (operand_bytes + out_bytes)))

    if batch_blocks == 1:
        # Single invocation: whole problem lives in VMEM, zero grid overhead.
        vmem = pl.BlockSpec(memory_space=pltpu.MemorySpace.VMEM)
        grid = ()
        in_specs = [vmem] * 5
        out_specs = (vmem, vmem, vmem)
        cparams = pltpu.CompilerParams(vmem_limit_bytes=vmem_limit)
    else:
        # Split the batch over a parallel grid axis (both TensorCores on v7x).
        grid = (batch_blocks,)
        in_specs = [
            pl.BlockSpec((bblk, Lq, H), lambda i: (i, 0, 0)),
            pl.BlockSpec((bblk, Lk, H), lambda i: (i, 0, 0)),
            pl.BlockSpec((bblk, Lq, Lk), lambda i: (i, 0, 0)),
            pl.BlockSpec((H, 2 * H), lambda i: (0, 0)),       # resident across steps
            pl.BlockSpec((4, H), lambda i: (0, 0)),
        ]
        out_specs = (
            pl.BlockSpec((bblk, Lq, H), lambda i: (i, 0, 0)),
            pl.BlockSpec((bblk, Lk, H), lambda i: (i, 0, 0)),
            pl.BlockSpec((bblk, Lq, Lk), lambda i: (i, 0, 0)),
        )
        cparams = pltpu.CompilerParams(
            dimension_semantics=("parallel",),
            vmem_limit_bytes=vmem_limit,
        )

    return pl.pallas_call(
        han_kernel,
        out_shape=out_shape,
        grid=grid,
        in_specs=in_specs,
        out_specs=out_specs,
        compiler_params=cparams,
    )(query, key, mask_i8, w_packed, p_packed)


def han_reference(query, key, attention_mask,
                  w_obs, b_obs, w_mat, b_mat, gamma, beta):
    H = query.shape[-1]
    score = jnp.einsum('bqd,bkd->bqk', query, key) / math.sqrt(H)
    score = jnp.where(attention_mask != 0, score, -jnp.inf)
    attn = jax.nn.softmax(score, axis=-1)
    context = jnp.einsum('bqk,bkd->bqd', attn, key)

    def lrl(x, w, b):
        y = jnp.maximum(x @ w.T + b, 0.0)
        mu = y.mean(-1, keepdims=True)
        var = ((y - mu) ** 2).mean(-1, keepdims=True)
        return (y - mu) * jax.lax.rsqrt(var + 1e-5) * gamma + beta

    return lrl(context, w_obs, b_obs), lrl(key, w_mat, b_mat), attn


if __name__ == "__main__":
    B, Lq, Lk, H = 2, 8, 8, 32

    key0 = jax.random.PRNGKey(0)
    kq, kk, km, k1, k2, k3, k4 = jax.random.split(key0, 7)

    query = jax.random.normal(kq, (B, Lq, H), dtype=jnp.float32)
    key_m = jax.random.normal(kk, (B, Lk, H), dtype=jnp.float32)
    mask = (jax.random.uniform(km, (B, Lq, Lk)) > 0.3).astype(jnp.int32)
    mask = mask.at[:, :, 0].set(1)   # at least one attendable position per query row

    bound = 1.0 / math.sqrt(H)
    w_obs = jax.random.uniform(k1, (H, H), minval=-bound, maxval=bound, dtype=jnp.float32)
    b_obs = jax.random.uniform(k2, (H,), minval=-bound, maxval=bound, dtype=jnp.float32)
    w_mat = jax.random.uniform(k3, (H, H), minval=-bound, maxval=bound, dtype=jnp.float32)
    b_mat = jax.random.uniform(k4, (H,), minval=-bound, maxval=bound, dtype=jnp.float32)
    gamma = jnp.ones((H,), dtype=jnp.float32)
    beta = jnp.zeros((H,), dtype=jnp.float32)

    rq, rk, rattn = han_reference(query, key_m, mask,
                                  w_obs, b_obs, w_mat, b_mat, gamma, beta)

    # 1) single-invocation path (best on single-TC v5e/v6e)
    nq, nk, attn = han_forward(query, key_m, mask,
                               w_obs, b_obs, w_mat, b_mat, gamma, beta,
                               batch_blocks=1)
    jax.block_until_ready((nq, nk, attn))
    assert jnp.allclose(nq, rq, atol=1e-4, rtol=1e-4)
    assert jnp.allclose(nk, rk, atol=1e-4, rtol=1e-4)
    assert jnp.allclose(attn, rattn, atol=1e-4, rtol=1e-4)

    # 2) parallel batch-grid path (uses both TensorCores on v7x)
    nq2, nk2, attn2 = han_forward(query, key_m, mask,
                                  w_obs, b_obs, w_mat, b_mat, gamma, beta,
                                  batch_blocks=2)
    jax.block_until_ready((nq2, nk2, attn2))
    assert jnp.allclose(nq2, rq, atol=1e-4, rtol=1e-4)
    assert jnp.allclose(nk2, rk, atol=1e-4, rtol=1e-4)
    assert jnp.allclose(attn2, rattn, atol=1e-4, rtol=1e-4)

    print("KERNEL_OK")
</pallas_src>

<mosaic_0001>
module attributes {stable_mosaic.version = 11 : i64} {
  func.func @han_kernel(%arg0: memref<2x8x32xf32, #tpu.memory_space<vmem>>, %arg1: memref<2x8x32xf32, #tpu.memory_space<vmem>>, %arg2: memref<2x8x8xi8, #tpu.memory_space<vmem>>, %arg3: memref<32x64xf32, #tpu.memory_space<vmem>>, %arg4: memref<4x32xf32, #tpu.memory_space<vmem>>, %arg5: memref<2x8x32xf32, #tpu.memory_space<vmem>>, %arg6: memref<2x8x32xf32, #tpu.memory_space<vmem>>, %arg7: memref<2x8x8xf32, #tpu.memory_space<vmem>>) attributes {dimension_semantics = [], scalar_prefetch = 0 : i64, scratch_operands = 0 : i64, tpu.core_type = #tpu.core_type<tc>} {
    %c0 = arith.constant 0 : index
    %c0_0 = arith.constant 0 : index
    %c0_1 = arith.constant 0 : index
    %0 = vector.load %arg0[%c0, %c0_0, %c0_1] : memref<2x8x32xf32, #tpu.memory_space<vmem>>, vector<2x8x32xf32>
    %c0_2 = arith.constant 0 : index
    %c0_3 = arith.constant 0 : index
    %c0_4 = arith.constant 0 : index
    %1 = vector.load %arg1[%c0_2, %c0_3, %c0_4] : memref<2x8x32xf32, #tpu.memory_space<vmem>>, vector<2x8x32xf32>
    "tpu.trace_start"() <{level = 10 : i32, message = "bqd,bkd->bqk"}> : () -> ()
    %cst = arith.constant dense<0.000000e+00> : vector<2x8x8xf32>
    %2 = tpu.matmul %0, %1, %cst {dimension_numbers = #tpu.dot_dimension_numbers<[2], [2], [1], [1], [0, 0, 0, 1, 1, 1], [0], [0]>} : vector<2x8x32xf32>, vector<2x8x32xf32>, vector<2x8x8xf32> -> vector<2x8x8xf32>
    "tpu.trace_stop"() : () -> ()
    %cst_5 = arith.constant 0.176776692 : f32
    %3 = vector.broadcast %cst_5 : f32 to vector<2x8x8xf32>
    %4 = arith.mulf %2, %3 : vector<2x8x8xf32>
    %c0_6 = arith.constant 0 : index
    %c0_7 = arith.constant 0 : index
    %c0_8 = arith.constant 0 : index
    %5 = vector.load %arg2[%c0_6, %c0_7, %c0_8] : memref<2x8x8xi8, #tpu.memory_space<vmem>>, vector<2x8x8xi8>
    %c0_i8 = arith.constant 0 : i8
    %6 = vector.broadcast %c0_i8 : i8 to vector<2x8x8xi8>
    %7 = arith.cmpi ne, %5, %6 : vector<2x8x8xi8>
    %cst_9 = arith.constant -1.000000e+30 : f32
    %8 = vector.broadcast %cst_9 : f32 to vector<2x8x8xf32>
    %9 = arith.select %7, %4, %8 : vector<2x8x8xi1>, vector<2x8x8xf32>
    %cst_10 = arith.constant dense<0xFF800000> : vector<2x8xf32>
    %10 = vector.multi_reduction <maximumf>, %9, %cst_10 [2] : vector<2x8x8xf32> to vector<2x8xf32>
    %11 = vector.shape_cast %10 : vector<2x8xf32> to vector<2x8x1xf32>
    %12 = vector.broadcast %11 : vector<2x8x1xf32> to vector<2x8x8xf32>
    %13 = arith.subf %9, %12 : vector<2x8x8xf32>
    %14 = math.exp %13 : vector<2x8x8xf32>
    %cst_11 = arith.constant dense<0.000000e+00> : vector<2x8xf32>
    %15 = vector.multi_reduction <add>, %14, %cst_11 [2] : vector<2x8x8xf32> to vector<2x8xf32>
    %16 = vector.shape_cast %15 : vector<2x8xf32> to vector<2x8x1xf32>
    %17 = vector.broadcast %16 : vector<2x8x1xf32> to vector<2x8x8xf32>
    %18 = arith.divf %14, %17 : vector<2x8x8xf32>
    %c0_12 = arith.constant 0 : index
    %c0_13 = arith.constant 0 : index
    %c0_14 = arith.constant 0 : index
    %19 = vector.load %arg7[%c0_12, %c0_13, %c0_14] : memref<2x8x8xf32, #tpu.memory_space<vmem>>, vector<2x8x8xf32>
    tpu.vector_store %arg7[%c0_12, %c0_13, %c0_14], %18 {strides = array<i32>} : memref<2x8x8xf32, #tpu.memory_space<vmem>>, vector<2x8x8xf32>,
    "tpu.trace_start"() <{level = 10 : i32, message = "bqk,bkd->bqd"}> : () -> ()
    %cst_15 = arith.constant dense<0.000000e+00> : vector<2x8x32xf32>
    %20 = tpu.matmul %18, %1, %cst_15 {dimension_numbers = #tpu.dot_dimension_numbers<[2], [1], [1], [2], [0, 0, 0, 1, 1, 2], [0], [0]>} : vector<2x8x8xf32>, vector<2x8x32xf32>, vector<2x8x32xf32> -> vector<2x8x32xf32>
    "tpu.trace_stop"() : () -> ()
    %21 = vector.shape_cast %20 : vector<2x8x32xf32> to vector<16x32xf32>
    %22 = vector.shape_cast %1 : vector<2x8x32xf32> to vector<16x32xf32>
    %23 = tpu.concatenate %21, %22 in 0 : vector<16x32xf32>, vector<16x32xf32> -> vector<32x32xf32>
    %c0_16 = arith.constant 0 : index
    %c0_17 = arith.constant 0 : index
    %24 = vector.load %arg3[%c0_16, %c0_17] : memref<32x64xf32, #tpu.memory_space<vmem>>, vector<32x64xf32>
    %cst_18 = arith.constant dense<0.000000e+00> : vector<32x64xf32>
    %25 = tpu.matmul %23, %24, %cst_18 {dimension_numbers = #tpu.dot_dimension_numbers<[1], [0], [0], [1], [0, 0, 1, 1], [], []>} : vector<32x32xf32>, vector<32x64xf32>, vector<32x64xf32> -> vector<32x64xf32>
    %c0_19 = arith.constant 0 : index
    %c0_20 = arith.constant 0 : index
    %26 = vector.load %arg4[%c0_19, %c0_20] : memref<4x32xf32, #tpu.memory_space<vmem>>, vector<1x32xf32>
    %c1 = arith.constant 1 : index
    %c0_21 = arith.constant 0 : index
    %27 = vector.load %arg4[%c1, %c0_21] : memref<4x32xf32, #tpu.memory_space<vmem>>, vector<1x32xf32>
    %c2 = arith.constant 2 : index
    %c0_22 = arith.constant 0 : index
    %28 = vector.load %arg4[%c2, %c0_22] : memref<4x32xf32, #tpu.memory_space<vmem>>, vector<1x32xf32>
    %c3 = arith.constant 3 : index
    %c0_23 = arith.constant 0 : index
    %29 = vector.load %arg4[%c3, %c0_23] : memref<4x32xf32, #tpu.memory_space<vmem>>, vector<1x32xf32>
    %30 = vector.extract_strided_slice %25 {offsets = [0, 0], sizes = [16, 32], strides = [1, 1]} : vector<32x64xf32> to vector<16x32xf32>
    %31 = vector.broadcast %26 : vector<1x32xf32> to vector<16x32xf32>
    %32 = arith.addf %30, %31 : vector<16x32xf32>
    %cst_24 = arith.constant 0.000000e+00 : f32
    %33 = vector.broadcast %cst_24 : f32 to vector<16x32xf32>
    %34 = arith.maximumf %32, %33 : vector<16x32xf32>
    %cst_25 = arith.constant dense<0.000000e+00> : vector<16xf32>
    %35 = vector.multi_reduction <add>, %34, %cst_25 [1] : vector<16x32xf32> to vector<16xf32>
    %36 = vector.shape_cast %35 : vector<16xf32> to vector<16x1xf32>
    %cst_26 = arith.constant 3.200000e+01 : f32
    %37 = vector.broadcast %cst_26 : f32 to vector<16x1xf32>
    %38 = arith.divf %36, %37 : vector<16x1xf32>
    %39 = vector.broadcast %38 : vector<16x1xf32> to vector<16x32xf32>
    %40 = arith.subf %34, %39 : vector<16x32xf32>
    %41 = arith.mulf %40, %40 : vector<16x32xf32>
    %cst_27 = arith.constant dense<0.000000e+00> : vector<16xf32>
    %42 = vector.multi_reduction <add>, %41, %cst_27 [1] : vector<16x32xf32> to vector<16xf32>
    %43 = vector.shape_cast %42 : vector<16xf32> to vector<16x1xf32>
    %cst_28 = arith.constant 3.200000e+01 : f32
    %44 = vector.broadcast %cst_28 : f32 to vector<16x1xf32>
    %45 = arith.divf %43, %44 : vector<16x1xf32>
    %46 = vector.broadcast %38 : vector<16x1xf32> to vector<16x32xf32>
    %47 = arith.subf %34, %46 : vector<16x32xf32>
    %cst_29 = arith.constant 9.99999974E-6 : f32
    %48 = vector.broadcast %cst_29 : f32 to vector<16x1xf32>
    %49 = arith.addf %45, %48 : vector<16x1xf32>
    %50 = math.rsqrt %49 : vector<16x1xf32>
    %51 = vector.broadcast %50 : vector<16x1xf32> to vector<16x32xf32>
    %52 = arith.mulf %47, %51 : vector<16x32xf32>
    %53 = vector.broadcast %28 : vector<1x32xf32> to vector<16x32xf32>
    %54 = arith.mulf %52, %53 : vector<16x32xf32>
    %55 = vector.broadcast %29 : vector<1x32xf32> to vector<16x32xf32>
    %56 = arith.addf %54, %55 : vector<16x32xf32>
    %57 = vector.extract_strided_slice %25 {offsets = [16, 32], sizes = [16, 32], strides = [1, 1]} : vector<32x64xf32> to vector<16x32xf32>
    %58 = vector.broadcast %27 : vector<1x32xf32> to vector<16x32xf32>
    %59 = arith.addf %57, %58 : vector<16x32xf32>
    %cst_30 = arith.constant 0.000000e+00 : f32
    %60 = vector.broadcast %cst_30 : f32 to vector<16x32xf32>
    %61 = arith.maximumf %59, %60 : vector<16x32xf32>
    %cst_31 = arith.constant dense<0.000000e+00> : vector<16xf32>
    %62 = vector.multi_reduction <add>, %61, %cst_31 [1] : vector<16x32xf32> to vector<16xf32>
    %63 = vector.shape_cast %62 : vector<16xf32> to vector<16x1xf32>
    %cst_32 = arith.constant 3.200000e+01 : f32
    %64 = vector.broadcast %cst_32 : f32 to vector<16x1xf32>
    %65 = arith.divf %63, %64 : vector<16x1xf32>
    %66 = vector.broadcast %65 : vector<16x1xf32> to vector<16x32xf32>
    %67 = arith.subf %61, %66 : vector<16x32xf32>
    %68 = arith.mulf %67, %67 : vector<16x32xf32>
    %cst_33 = arith.constant dense<0.000000e+00> : vector<16xf32>
    %69 = vector.multi_reduction <add>, %68, %cst_33 [1] : vector<16x32xf32> to vector<16xf32>
    %70 = vector.shape_cast %69 : vector<16xf32> to vector<16x1xf32>
    %cst_34 = arith.constant 3.200000e+01 : f32
    %71 = vector.broadcast %cst_34 : f32 to vector<16x1xf32>
    %72 = arith.divf %70, %71 : vector<16x1xf32>
    %73 = vector.broadcast %65 : vector<16x1xf32> to vector<16x32xf32>
    %74 = arith.subf %61, %73 : vector<16x32xf32>
    %cst_35 = arith.constant 9.99999974E-6 : f32
    %75 = vector.broadcast %cst_35 : f32 to vector<16x1xf32>
    %76 = arith.addf %72, %75 : vector<16x1xf32>
    %77 = math.rsqrt %76 : vector<16x1xf32>
    %78 = vector.broadcast %77 : vector<16x1xf32> to vector<16x32xf32>
    %79 = arith.mulf %74, %78 : vector<16x32xf32>
    %80 = vector.broadcast %28 : vector<1x32xf32> to vector<16x32xf32>
    %81 = arith.mulf %79, %80 : vector<16x32xf32>
    %82 = vector.broadcast %29 : vector<1x32xf32> to vector<16x32xf32>
    %83 = arith.addf %81, %82 : vector<16x32xf32>
    %84 = vector.shape_cast %56 : vector<16x32xf32> to vector<2x8x32xf32>
    %c0_36 = arith.constant 0 : index
    %c0_37 = arith.constant 0 : index
    %c0_38 = arith.constant 0 : index
    %85 = vector.load %arg5[%c0_36, %c0_37, %c0_38] : memref<2x8x32xf32, #tpu.memory_space<vmem>>, vector<2x8x32xf32>
    tpu.vector_store %arg5[%c0_36, %c0_37, %c0_38], %84 {strides = array<i32>} : memref<2x8x32xf32, #tpu.memory_space<vmem>>, vector<2x8x32xf32>,
    %86 = vector.shape_cast %83 : vector<16x32xf32> to vector<2x8x32xf32>
    %c0_39 = arith.constant 0 : index
    %c0_40 = arith.constant 0 : index
    %c0_41 = arith.constant 0 : index
    %87 = vector.load %arg6[%c0_39, %c0_40, %c0_41] : memref<2x8x32xf32, #tpu.memory_space<vmem>>, vector<2x8x32xf32>
    tpu.vector_store %arg6[%c0_39, %c0_40, %c0_41], %86 {strides = array<i32>} : memref<2x8x32xf32, #tpu.memory_space<vmem>>, vector<2x8x32xf32>,
    return
  }
}

</mosaic_0001>

<llo_original>
// kernel: tpu_custom_call.1
$region0: #{tpu_custom_call.1}
  #allocation0 [shape = 'u32[]', space=smem, size = 0x4, offset = 0x4, fixed_abs, tag = 'smem constant byte address 0x4 - core index']
  #allocation1 [shape = 'u32[144,128]{1,0:T(1,128)}', space=vmem, size = 0x12000, scoped, tag = 'internal scratch']
  %s0 = inlined_call_operand.hbm [shape: f32[2,8,32], index: 0, kind: input, shape index: {}]
  %s1 = inlined_call_operand.hbm [shape: f32[2,8,32], index: 1, kind: input, shape index: {}]
  %s2 = inlined_call_operand.vmem [shape: s8[2,8,8], index: 2, kind: input, shape index: {}]
  %s3 = inlined_call_operand.hbm [shape: f32[32,64], index: 3, kind: input, shape index: {}]
  %s4 = inlined_call_operand.vmem [shape: f32[4,32], index: 4, kind: input, shape index: {}]
  %s5 = inlined_call_operand.hbm [shape: f32[2,8,32], index: 5, kind: output, shape index: {0}]
  %s6 = inlined_call_operand.hbm [shape: f32[2,8,32], index: 6, kind: output, shape index: {1}]
  %s7 = inlined_call_operand.hbm [shape: f32[2,8,8], index: 7, kind: output, shape index: {2}]
  %8 = xla_tuple %s5, %s6, %s7
  %s9 = sld [smem:[#allocation0]]
  $region58: #{tpu_custom_call.1} parent=0
    _
  %s11 = ssub.s32 1, %s9
  %s12 = scalar_select 0, %s11, %s9
  $region1: #{tpu_custom_call.1} parent=0
    #allocation2 [shape = 'u8[8192]{0}', space=vmem, size = 0x2000, scoped, tag = 'input window, operand 0, single buffered']
    #allocation3 [shape = 's32[1]{0}', space=sflag, size = 0x4, scoped, tag = 'scoped memory for tpu_custom_call.1']
    #allocation4 [shape = 's32[1]{0}', space=sflag, size = 0x4, scoped, tag = 'scoped memory for tpu_custom_call.1']
    #allocation5 [shape = 'u8[8192]{0}', space=vmem, size = 0x2000, scoped, tag = 'input window, operand 1, single buffered']
    #allocation6 [shape = 's32[1]{0}', space=sflag, size = 0x4, scoped, tag = 'scoped memory for tpu_custom_call.1']
    #allocation7 [shape = 'u8[16384]{0}', space=vmem, size = 0x4000, scoped, tag = 'input window, operand 3, single buffered']
    #allocation8 [shape = 'u8[8192]{0}', space=vmem, size = 0x2000, scoped, tag = 'output window, operand 0, single buffered']
    #allocation9 [shape = 'u8[8192]{0}', space=vmem, size = 0x2000, scoped, tag = 'output window, operand 1, single buffered']
    #allocation10 [shape = 's32[1]{0}', space=sflag, size = 0x4, scoped, tag = 'scoped memory for tpu_custom_call.1']
    #allocation11 [shape = 'u8[8192]{0}', space=vmem, size = 0x2000, scoped, tag = 'output window, operand 2, single buffered']
    %13 = vsyncpa [#allocation3], 0
    %14 = vsyncpa [#allocation6], 0
    %15 = vsyncpa [#allocation4], 0
    %16 = vsyncpa [#allocation10], 0
    // Predicated region
    $region2: #{tpu_custom_call.1} parent=1 // pred_check
      _
    $region3: #{tpu_custom_call.1} parent=1 // pred_check_branch
      %18 = sbr.rel (0) target = $region5
    $region4: #{tpu_custom_call.1} parent=1 // pred_region
      %s20 = ssub.s32 256, 256
      %21 = vsyncadd [#allocation3], %s20
      %s22 = sshll.u32 [#allocation2], 4
      %s23 = int_to_ptr.vmem [resolvable:$true] %s22
      %28 = dma.hbm_to_vmem [thread:$0]  %s0, 256, %s23, [#allocation3], 128, 128, 8
    $region5: #{tpu_custom_call.1} parent=1 // pred_fallthru
      _
    // Predicated region
    $region6: #{tpu_custom_call.1} parent=1 // pred_check
      _
    $region7: #{tpu_custom_call.1} parent=1 // pred_check_branch
      %30 = sbr.rel (0) target = $region9
    $region8: #{tpu_custom_call.1} parent=1 // pred_region
      %s32 = ssub.s32 256, 256
      %33 = vsyncadd [#allocation6], %s32
      %s34 = sshll.u32 [#allocation5], 4
      %s35 = int_to_ptr.vmem [resolvable:$true] %s34
      %40 = dma.hbm_to_vmem [thread:$0]  %s1, 256, %s35, [#allocation6], 128, 128, 8
    $region9: #{tpu_custom_call.1} parent=1 // pred_fallthru
      _
    // Predicated region
    $region10: #{tpu_custom_call.1} parent=1 // pred_check
      _
    $region11: #{tpu_custom_call.1} parent=1 // pred_check_branch
      %42 = sbr.rel (0) target = $region13
    $region12: #{tpu_custom_call.1} parent=1 // pred_region
      _
    $region13: #{tpu_custom_call.1} parent=1 // pred_fallthru
      _
    // Predicated region
    $region14: #{tpu_custom_call.1} parent=1 // pred_check
      _
    $region15: #{tpu_custom_call.1} parent=1 // pred_check_branch
      %44 = sbr.rel (0) target = $region17
    $region16: #{tpu_custom_call.1} parent=1 // pred_region
      %s46 = ssub.s32 512, 512
      %47 = vsyncadd [#allocation6], %s46
      %s48 = sshll.u32 [#allocation7], 4
      %s49 = int_to_ptr.vmem [resolvable:$true] %s48
      %54 = dma.hbm_to_vmem [thread:$0]  %s3, 512, %s49, [#allocation6], 128, 128, 8
    $region17: #{tpu_custom_call.1} parent=1 // pred_fallthru
      _
    // Predicated region
    $region18: #{tpu_custom_call.1} parent=1 // pred_check
      _
    $region19: #{tpu_custom_call.1} parent=1 // pred_check_branch
      %56 = sbr.rel (0) target = $region21
    $region20: #{tpu_custom_call.1} parent=1 // pred_region
      _
    $region21: #{tpu_custom_call.1} parent=1 // pred_fallthru
      _
    // Predicated region
    $region22: #{tpu_custom_call.1} parent=1 // pred_check
      _
    $region23: #{tpu_custom_call.1} parent=1 // pred_check_branch
      %58 = sbr.rel (0) target = $region25
    $region24: #{tpu_custom_call.1} parent=1 // pred_region
      %59 = dma.done [#allocation3], 256
    $region25: #{tpu_custom_call.1} parent=1 // pred_fallthru
      _
    // Predicated region
    $region26: #{tpu_custom_call.1} parent=1 // pred_check
      _
    $region27: #{tpu_custom_call.1} parent=1 // pred_check_branch
      %61 = sbr.rel (0) target = $region29
    $region28: #{tpu_custom_call.1} parent=1 // pred_region
      %62 = dma.done [#allocation6], 256
    $region29: #{tpu_custom_call.1} parent=1 // pred_fallthru
      _
    // Predicated region
    $region30: #{tpu_custom_call.1} parent=1 // pred_check
      _
    $region31: #{tpu_custom_call.1} parent=1 // pred_check_branch
      %64 = sbr.rel (0) target = $region33
    $region32: #{tpu_custom_call.1} parent=1 // pred_region
      %65 = dma.done [#allocation6], 512
    $region33: #{tpu_custom_call.1} parent=1 // pred_fallthru
      _
    %v68 = vld [vmem:[#allocation2] sm:$0xff]
    %v69 = vld [vmem:[#allocation2 + $0x8] sm:$0xff]
    %v70 = vld [vmem:[#allocation5] sm:$0xff]
    %v71 = vld [vmem:[#allocation5 + $0x8] sm:$0xff]
    %vm72 = vcmask 261120
    %v74 = vsel %vm72, %v68, 0
    %v77 = vsel %vm72, %v70, 0
    %79 = vmatprep.subr.mxu0 0.0
    %80 = vmatpush1.xpose.msra.mxu0 %v77
    %81 = vmatprep.subr.mxu0 0.0
    %82 = vmatpush1.xpose.msra.mxu0 0.0
    %83 = vmatprep.subr.mxu0 0.0
    %84 = vmatpush1.xpose.msra.mxu0 0.0
    %85 = vmatprep.subr.mxu0 0.0
    %86 = vmatpush1.xpose.msra.mxu0 0.0
    %87 = vmatprep.subr.mxu0 0.0
    %88 = vmatpush1.xpose.msra.mxu0 0.0
    %89 = vmatprep.subr.mxu0 0.0
    %90 = vmatpush1.xpose.msra.mxu0 0.0
    %91 = vmatprep.subr.mxu0 0.0
    %92 = vmatpush1.xpose.msra.mxu0 0.0
    %93 = vmatprep.subr.mxu0 0.0
    %94 = vmatpush1.xpose.msra.mxu0 0.0
    %95 = vmatprep.subr.mxu0 0.0
    %96 = vmatpush1.xpose.msra.mxu0 0.0
    %97 = vmatprep.subr.mxu0 0.0
    %98 = vmatpush1.xpose.msra.mxu0 0.0
    %99 = vmatprep.subr.mxu0 0.0
    %100 = vmatpush1.xpose.msra.mxu0 0.0
    %101 = vmatprep.subr.mxu0 0.0
    %102 = vmatpush1.xpose.msra.mxu0 0.0
    %103 = vmatprep.subr.mxu0 0.0
    %104 = vmatpush1.xpose.msra.mxu0 0.0
    %105 = vmatprep.subr.mxu0 0.0
    %106 = vmatpush1.xpose.msra.mxu0 0.0
    %107 = vmatprep.subr.mxu0 0.0
    %108 = vmatpush1.xpose.msra.mxu0 0.0
    %109 = vmatprep.subr.mxu0 0.0
    %110 = vmatpush1.xpose.msra.mxu0 0.0
    %111 = vmatprep.subr.mxu0 0.0
    %112 = vmatpush1.xpose.msra.mxu0 0.0
    %113 = vmatprep.subr.mxu0 0.0
    %114 = vmatpush1.xpose.msra.mxu0 0.0
    %115 = vmatprep.subr.mxu0 0.0
    %116 = vmatpush1.xpose.msra.mxu0 0.0
    %117 = vmatprep.subr.mxu0 0.0
    %118 = vmatpush1.xpose.msra.mxu0 0.0
    %119 = vmatprep.subr.mxu0 0.0
    %120 = vmatpush1.xpose.msra.mxu0 0.0
    %121 = vmatprep.subr.mxu0 0.0
    %122 = vmatpush1.xpose.msra.mxu0 0.0
    %123 = vmatprep.subr.mxu0 0.0
    %124 = vmatpush1.xpose.msra.mxu0 0.0
    %125 = vmatprep.subr.mxu0 0.0
    %126 = vmatpush1.xpose.msra.mxu0 0.0
    %127 = vmatprep.subr.mxu0 0.0
    %128 = vmatpush1.xpose.msra.mxu0 0.0
    %129 = vmatprep.subr.mxu0 0.0
    %130 = vmatpush1.xpose.msra.mxu0 0.0
    %131 = vmatprep.subr.mxu0 0.0
    %132 = vmatpush1.xpose.msra.mxu0 0.0
    %133 = vmatprep.subr.mxu0 0.0
    %134 = vmatpush1.xpose.msra.mxu0 0.0
    %135 = vmatprep.subr.mxu0 0.0
    %136 = vmatpush1.xpose.msra.mxu0 0.0
    %137 = vmatprep.subr.mxu0 0.0
    %138 = vmatpush1.xpose.msra.mxu0 0.0
    %139 = vmatprep.subr.mxu0 0.0
    %140 = vmatpush1.xpose.msra.mxu0 0.0
    %141 = vmatprep.subr.mxu0 0.0
    %142 = vmatpush1.xpose.msra.mxu0 0.0
    %143 = vmatprep.mubr.f32.mxu0 0.0
    %144 = vmatmul.mubr.f32.gmra.mrb[0].mxu0 %v74
    %v145 = vpop.f32.mrb[0].mxu0
    %v146 = vadd.f32 0.0, %v145
    %v147 = vpop.f32.mrb[0].mxu0
    %148 = vdwg.mxu0
    %v150 = vsel %vm72, %v69, 0
    %v153 = vsel %vm72, %v71, 0
    %155 = vmatprep.subr.mxu0 0.0
    %156 = vmatpush1.xpose.msra.mxu0 %v153
    %157 = vmatprep.subr.mxu0 0.0
    %158 = vmatpush1.xpose.msra.mxu0 0.0
    %159 = vmatprep.subr.mxu0 0.0
    %160 = vmatpush1.xpose.msra.mxu0 0.0
    %161 = vmatprep.subr.mxu0 0.0
    %162 = vmatpush1.xpose.msra.mxu0 0.0
    %163 = vmatprep.subr.mxu0 0.0
    %164 = vmatpush1.xpose.msra.mxu0 0.0
    %165 = vmatprep.subr.mxu0 0.0
    %166 = vmatpush1.xpose.msra.mxu0 0.0
    %167 = vmatprep.subr.mxu0 0.0
    %168 = vmatpush1.xpose.msra.mxu0 0.0
    %169 = vmatprep.subr.mxu0 0.0
    %170 = vmatpush1.xpose.msra.mxu0 0.0
    %171 = vmatprep.subr.mxu0 0.0
    %172 = vmatpush1.xpose.msra.mxu0 0.0
    %173 = vmatprep.subr.mxu0 0.0
    %174 = vmatpush1.xpose.msra.mxu0 0.0
    %175 = vmatprep.subr.mxu0 0.0
    %176 = vmatpush1.xpose.msra.mxu0 0.0
    %177 = vmatprep.subr.mxu0 0.0
    %178 = vmatpush1.xpose.msra.mxu0 0.0
    %179 = vmatprep.subr.mxu0 0.0
    %180 = vmatpush1.xpose.msra.mxu0 0.0
    %181 = vmatprep.subr.mxu0 0.0
    %182 = vmatpush1.xpose.msra.mxu0 0.0
    %183 = vmatprep.subr.mxu0 0.0
    %184 = vmatpush1.xpose.msra.mxu0 0.0
    %185 = vmatprep.subr.mxu0 0.0
    %186 = vmatpush1.xpose.msra.mxu0 0.0
    %187 = vmatprep.subr.mxu0 0.0
    %188 = vmatpush1.xpose.msra.mxu0 0.0
    %189 = vmatprep.subr.mxu0 0.0
    %190 = vmatpush1.xpose.msra.mxu0 0.0
    %191 = vmatprep.subr.mxu0 0.0
    %192 = vmatpush1.xpose.msra.mxu0 0.0
    %193 = vmatprep.subr.mxu0 0.0
    %194 = vmatpush1.xpose.msra.mxu0 0.0
    %195 = vmatprep.subr.mxu0 0.0
    %196 = vmatpush1.xpose.msra.mxu0 0.0
    %197 = vmatprep.subr.mxu0 0.0
    %198 = vmatpush1.xpose.msra.mxu0 0.0
    %199 = vmatprep.subr.mxu0 0.0
    %200 = vmatpush1.xpose.msra.mxu0 0.0
    %201 = vmatprep.subr.mxu0 0.0
    %202 = vmatpush1.xpose.msra.mxu0 0.0
    %203 = vmatprep.subr.mxu0 0.0
    %204 = vmatpush1.xpose.msra.mxu0 0.0
    %205 = vmatprep.subr.mxu0 0.0
    %206 = vmatpush1.xpose.msra.mxu0 0.0
    %207 = vmatprep.subr.mxu0 0.0
    %208 = vmatpush1.xpose.msra.mxu0 0.0
    %209 = vmatprep.subr.mxu0 0.0
    %210 = vmatpush1.xpose.msra.mxu0 0.0
    %211 = vmatprep.subr.mxu0 0.0
    %212 = vmatpush1.xpose.msra.mxu0 0.0
    %213 = vmatprep.subr.mxu0 0.0
    %214 = vmatpush1.xpose.msra.mxu0 0.0
    %215 = vmatprep.subr.mxu0 0.0
    %216 = vmatpush1.xpose.msra.mxu0 0.0
    %217 = vmatprep.subr.mxu0 0.0
    %218 = vmatpush1.xpose.msra.mxu0 0.0
    %219 = vmatprep.mubr.f32.mxu0 0.0
    %220 = vmatmul.mubr.f32.gmra.mrb[0].mxu0 %v150
    %v221 = vpop.f32.mrb[0].mxu0
    %v222 = vadd.f32 0.0, %v221
    %v223 = vpop.f32.mrb[0].mxu0
    %224 = vdwg.mxu0
    %v225 = vmul.f32 %v146, 0.17677669
    %v226 = vmul.f32 %v222, 0.17677669
    %v227 = vld [vmem:[%s2] sm:$0x3]
    %v228 = vld [vmem:[%s2 + $0x2] sm:$0x3]
    %vm229 = vnez %v227
    %vm230 = vnez %v228
    %v231 = vsel %vm229, 16843009, 0
    %v232 = vsel %vm230, 16843009, 0
    %v233 = vunpack.c.0.s8 %v231
    %v234 = vunpack.c.0.s8 %v232
    %vm235 = vcmp.ne.s32.totalorder %v233, 0
    %vm236 = vcmp.ne.s32.totalorder %v234, 0
    %v237 = vsel %vm235, %v225, -1e+30
    %v238 = vsel %vm236, %v226, -1e+30
    %vm239 = vcmask 64512
    %v240 = vsel %vm239, %v237, -inf
    %241 = vmax.xlane.f32.xlu0 %v240
    %v242 = vpop.xlane.xlu0 %241
    %v243 = vsel %vm239, %v238, -inf
    %244 = vmax.xlane.f32.xlu0 %v243
    %v245 = vpop.xlane.xlu0 %244
    %v246 = vsub.f32 %v237, %v242
    %v247 = vsub.f32 %v238, %v245
    %v248 = vmul.f32 %v246, 1.442695
    %v249 = vpow.pop %v248
    %v250 = vmul.f32 %v247, 1.442695
    %v251 = vpow.pop %v250
    %v252 = vsel %vm239, %v249, 0.0
    %253 = vadd.xlane.f32.xlu0 %v252
    %v254 = vpop.xlane.xlu0 %253
    %v255 = vsel %vm239, %v251, 0.0
    %256 = vadd.xlane.f32.xlu0 %v255
    %v257 = vpop.xlane.xlu0 %256
    %v258 = vrcp.pop %v254
    %v259 = vmul.f32 %v249, %v258
    %v260 = vrcp.pop %v257
    %v261 = vmul.f32 %v251, %v260
    %262 = vst.msk [vmem:[#allocation11] sm:$0xff] %vm239, %v259
    %263 = vst.msk [vmem:[#allocation11 + $0x8] sm:$0xff] %vm239, %v261
    %v265 = vsel %vm239, %v259, 0
    %267 = vmatprep.subr.mxu0 0.0
    %268 = vmatpush1.msra.mxu0 %v70
    %269 = vmatprep.subr.mxu0 0.0
    %270 = vmatpush1.msra.mxu0 0.0
    %271 = vmatprep.subr.mxu0 0.0
    %272 = vmatpush1.msra.mxu0 0.0
    %273 = vmatprep.subr.mxu0 0.0
    %274 = vmatpush1.msra.mxu0 0.0
    %275 = vmatprep.subr.mxu0 0.0
    %276 = vmatpush1.msra.mxu0 0.0
    %277 = vmatprep.subr.mxu0 0.0
    %278 = vmatpush1.msra.mxu0 0.0
    %279 = vmatprep.subr.mxu0 0.0
    %280 = vmatpush1.msra.mxu0 0.0
    %281 = vmatprep.subr.mxu0 0.0
    %282 = vmatpush1.msra.mxu0 0.0
    %283 = vmatprep.subr.mxu0 0.0
    %284 = vmatpush1.msra.mxu0 0.0
    %285 = vmatprep.subr.mxu0 0.0
    %286 = vmatpush1.msra.mxu0 0.0
    %287 = vmatprep.subr.mxu0 0.0
    %288 = vmatpush1.msra.mxu0 0.0
    %289 = vmatprep.subr.mxu0 0.0
    %290 = vmatpush1.msra.mxu0 0.0
    %291 = vmatprep.subr.mxu0 0.0
    %292 = vmatpush1.msra.mxu0 0.0
    %293 = vmatprep.subr.mxu0 0.0
    %294 = vmatpush1.msra.mxu0 0.0
    %295 = vmatprep.subr.mxu0 0.0
    %296 = vmatpush1.msra.mxu0 0.0
    %297 = vmatprep.subr.mxu0 0.0
    %298 = vmatpush1.msra.mxu0 0.0
    %299 = vmatprep.subr.mxu0 0.0
    %300 = vmatpush1.msra.mxu0 0.0
    %301 = vmatprep.subr.mxu0 0.0
    %302 = vmatpush1.msra.mxu0 0.0
    %303 = vmatprep.subr.mxu0 0.0
    %304 = vmatpush1.msra.mxu0 0.0
    %305 = vmatprep.subr.mxu0 0.0
    %306 = vmatpush1.msra.mxu0 0.0
    %307 = vmatprep.subr.mxu0 0.0
    %308 = vmatpush1.msra.mxu0 0.0
    %309 = vmatprep.subr.mxu0 0.0
    %310 = vmatpush1.msra.mxu0 0.0
    %311 = vmatprep.subr.mxu0 0.0
    %312 = vmatpush1.msra.mxu0 0.0
    %313 = vmatprep.subr.mxu0 0.0
    %314 = vmatpush1.msra.mxu0 0.0
    %315 = vmatprep.subr.mxu0 0.0
    %316 = vmatpush1.msra.mxu0 0.0
    %317 = vmatprep.subr.mxu0 0.0
    %318 = vmatpush1.msra.mxu0 0.0
    %319 = vmatprep.subr.mxu0 0.0
    %320 = vmatpush1.msra.mxu0 0.0
    %321 = vmatprep.subr.mxu0 0.0
    %322 = vmatpush1.msra.mxu0 0.0
    %323 = vmatprep.subr.mxu0 0.0
    %324 = vmatpush1.msra.mxu0 0.0
    %325 = vmatprep.subr.mxu0 0.0
    %326 = vmatpush1.msra.mxu0 0.0
    %327 = vmatprep.subr.mxu0 0.0
    %328 = vmatpush1.msra.mxu0 0.0
    %329 = vmatprep.subr.mxu0 0.0
    %330 = vmatpush1.msra.mxu0 0.0
    %331 = vmatprep.mubr.f32.mxu0 0.0
    %332 = vmatmul.mubr.f32.gmra.mrb[0].mxu0 %v265
    %v333 = vpop.f32.mrb[0].mxu0
    %v334 = vadd.f32 0.0, %v333
    %v335 = vpop.f32.mrb[0].mxu0
    %336 = vdwg.mxu0
    %v338 = vsel %vm239, %v261, 0
    %340 = vmatprep.subr.mxu0 0.0
    %341 = vmatpush1.msra.mxu0 %v71
    %342 = vmatprep.subr.mxu0 0.0
    %343 = vmatpush1.msra.mxu0 0.0
    %344 = vmatprep.subr.mxu0 0.0
    %345 = vmatpush1.msra.mxu0 0.0
    %346 = vmatprep.subr.mxu0 0.0
    %347 = vmatpush1.msra.mxu0 0.0
    %348 = vmatprep.subr.mxu0 0.0
    %349 = vmatpush1.msra.mxu0 0.0
    %350 = vmatprep.subr.mxu0 0.0
    %351 = vmatpush1.msra.mxu0 0.0
    %352 = vmatprep.subr.mxu0 0.0
    %353 = vmatpush1.msra.mxu0 0.0
    %354 = vmatprep.subr.mxu0 0.0
    %355 = vmatpush1.msra.mxu0 0.0
    %356 = vmatprep.subr.mxu0 0.0
    %357 = vmatpush1.msra.mxu0 0.0
    %358 = vmatprep.subr.mxu0 0.0
    %359 = vmatpush1.msra.mxu0 0.0
    %360 = vmatprep.subr.mxu0 0.0
    %361 = vmatpush1.msra.mxu0 0.0
    %362 = vmatprep.subr.mxu0 0.0
    %363 = vmatpush1.msra.mxu0 0.0
    %364 = vmatprep.subr.mxu0 0.0
    %365 = vmatpush1.msra.mxu0 0.0
    %366 = vmatprep.subr.mxu0 0.0
    %367 = vmatpush1.msra.mxu0 0.0
    %368 = vmatprep.subr.mxu0 0.0
    %369 = vmatpush1.msra.mxu0 0.0
    %370 = vmatprep.subr.mxu0 0.0
    %371 = vmatpush1.msra.mxu0 0.0
    %372 = vmatprep.subr.mxu0 0.0
    %373 = vmatpush1.msra.mxu0 0.0
    %374 = vmatprep.subr.mxu0 0.0
    %375 = vmatpush1.msra.mxu0 0.0
    %376 = vmatprep.subr.mxu0 0.0
    %377 = vmatpush1.msra.mxu0 0.0
    %378 = vmatprep.subr.mxu0 0.0
    %379 = vmatpush1.msra.mxu0 0.0
    %380 = vmatprep.subr.mxu0 0.0
    %381 = vmatpush1.msra.mxu0 0.0
    %382 = vmatprep.subr.mxu0 0.0
    %383 = vmatpush1.msra.mxu0 0.0
    %384 = vmatprep.subr.mxu0 0.0
    %385 = vmatpush1.msra.mxu0 0.0
    %386 = vmatprep.subr.mxu0 0.0
    %387 = vmatpush1.msra.mxu0 0.0
    %388 = vmatprep.subr.mxu0 0.0
    %389 = vmatpush1.msra.mxu0 0.0
    %390 = vmatprep.subr.mxu0 0.0
    %391 = vmatpush1.msra.mxu0 0.0
    %392 = vmatprep.subr.mxu0 0.0
    %393 = vmatpush1.msra.mxu0 0.0
    %394 = vmatprep.subr.mxu0 0.0
    %395 = vmatpush1.msra.mxu0 0.0
    %396 = vmatprep.subr.mxu0 0.0
    %397 = vmatpush1.msra.mxu0 0.0
    %398 = vmatprep.subr.mxu0 0.0
    %399 = vmatpush1.msra.mxu0 0.0
    %400 = vmatprep.subr.mxu0 0.0
    %401 = vmatpush1.msra.mxu0 0.0
    %402 = vmatprep.subr.mxu0 0.0
    %403 = vmatpush1.msra.mxu0 0.0
    %404 = vmatprep.mubr.f32.mxu0 0.0
    %405 = vmatmul.mubr.f32.gmra.mrb[0].mxu0 %v338
    %v406 = vpop.f32.mrb[0].mxu0
    %v407 = vadd.f32 0.0, %v406
    %v408 = vpop.f32.mrb[0].mxu0
    %409 = vdwg.mxu0
    %v410 = vld [vmem:[#allocation7] sm:$0xff]
    %v411 = vld [vmem:[#allocation7 + $0x8] sm:$0xff]
    %v412 = vld [vmem:[#allocation7 + $0x10] sm:$0xff]
    %v413 = vld [vmem:[#allocation7 + $0x18] sm:$0xff]
    %v415 = vsel %vm72, %v334, 0
    %v418 = vsel %vm72, %v407, 0
    %420 = vmatprep.subr.mxu0 0.0
    %421 = vmatpush1.msra.mxu0 %v410
    %422 = vmatprep.subr.mxu0 0.0
    %423 = vmatpush1.msra.mxu0 %v411
    %424 = vmatprep.subr.mxu0 0.0
    %425 = vmatpush1.msra.mxu0 %v412
    %426 = vmatprep.subr.mxu0 0.0
    %427 = vmatpush1.msra.mxu0 %v413
    %428 = vmatprep.subr.mxu0 0.0
    %429 = vmatpush1.msra.mxu0 0.0
    %430 = vmatprep.subr.mxu0 0.0
    %431 = vmatpush1.msra.mxu0 0.0
    %432 = vmatprep.subr.mxu0 0.0
    %433 = vmatpush1.msra.mxu0 0.0
    %434 = vmatprep.subr.mxu0 0.0
    %435 = vmatpush1.msra.mxu0 0.0
    %436 = vmatprep.subr.mxu0 0.0
    %437 = vmatpush1.msra.mxu0 0.0
    %438 = vmatprep.subr.mxu0 0.0
    %439 = vmatpush1.msra.mxu0 0.0
    %440 = vmatprep.subr.mxu0 0.0
    %441 = vmatpush1.msra.mxu0 0.0
    %442 = vmatprep.subr.mxu0 0.0
    %443 = vmatpush1.msra.mxu0 0.0
    %444 = vmatprep.subr.mxu0 0.0
    %445 = vmatpush1.msra.mxu0 0.0
    %446 = vmatprep.subr.mxu0 0.0
    %447 = vmatpush1.msra.mxu0 0.0
    %448 = vmatprep.subr.mxu0 0.0
    %449 = vmatpush1.msra.mxu0 0.0
    %450 = vmatprep.subr.mxu0 0.0
    %451 = vmatpush1.msra.mxu0 0.0
    %452 = vmatprep.subr.mxu0 0.0
    %453 = vmatpush1.msra.mxu0 0.0
    %454 = vmatprep.subr.mxu0 0.0
    %455 = vmatpush1.msra.mxu0 0.0
    %456 = vmatprep.subr.mxu0 0.0
    %457 = vmatpush1.msra.mxu0 0.0
    %458 = vmatprep.subr.mxu0 0.0
    %459 = vmatpush1.msra.mxu0 0.0
    %460 = vmatprep.subr.mxu0 0.0
    %461 = vmatpush1.msra.mxu0 0.0
    %462 = vmatprep.subr.mxu0 0.0
    %463 = vmatpush1.msra.mxu0 0.0
    %464 = vmatprep.subr.mxu0 0.0
    %465 = vmatpush1.msra.mxu0 0.0
    %466 = vmatprep.subr.mxu0 0.0
    %467 = vmatpush1.msra.mxu0 0.0
    %468 = vmatprep.subr.mxu0 0.0
    %469 = vmatpush1.msra.mxu0 0.0
    %470 = vmatprep.subr.mxu0 0.0
    %471 = vmatpush1.msra.mxu0 0.0
    %472 = vmatprep.subr.mxu0 0.0
    %473 = vmatpush1.msra.mxu0 0.0
    %474 = vmatprep.subr.mxu0 0.0
    %475 = vmatpush1.msra.mxu0 0.0
    %476 = vmatprep.subr.mxu0 0.0
    %477 = vmatpush1.msra.mxu0 0.0
    %478 = vmatprep.subr.mxu0 0.0
    %479 = vmatpush1.msra.mxu0 0.0
    %480 = vmatprep.subr.mxu0 0.0
    %481 = vmatpush1.msra.mxu0 0.0
    %482 = vmatprep.subr.mxu0 0.0
    %483 = vmatpush1.msra.mxu0 0.0
    %484 = vmatprep.mubr.f32.mxu0 0.0
    %485 = vmatmul.mubr.f32.gmra.mrb[0].mxu0 %v415
    %v486 = vpop.f32.mrb[0].mxu0
    %v487 = vadd.f32 0.0, %v486
    %v488 = vpop.f32.mrb[0].mxu0
    %489 = vmatprep.mubr.f32.mxu0 0.0
    %490 = vmatmul.mubr.f32.gmra.mrb[0].mxu0 %v418
    %v491 = vpop.f32.mrb[0].mxu0
    %v492 = vadd.f32 0.0, %v491
    %v493 = vpop.f32.mrb[0].mxu0
    %494 = vmatprep.mubr.f32.mxu0 0.0
    %495 = vmatmul.mubr.f32.gmra.mrb[0].mxu0 %v77
    %v496 = vpop.f32.mrb[0].mxu0
    %v497 = vadd.f32 0.0, %v496
    %v498 = vpop.f32.mrb[0].mxu0
    %499 = vmatprep.mubr.f32.mxu0 0.0
    %500 = vmatmul.mubr.f32.gmra.mrb[0].mxu0 %v153
    %v501 = vpop.f32.mrb[0].mxu0
    %v502 = vadd.f32 0.0, %v501
    %v503 = vpop.f32.mrb[0].mxu0
    %504 = vdwg.mxu0
    %v505 = vld [vmem:[%s4] sm:$0x1]
    %v506 = vld [vmem:[%s4 + $0x1] sm:$0x1]
    %v507 = vld [vmem:[%s4 + $0x2] sm:$0x1]
    %v508 = vld [vmem:[%s4 + $0x3] sm:$0x1]
    %v509 = vlaneseq
    %v510 = vshrl.u32 %v509, 7
    %v511 = vsub.s32 0, %v510
    %v512 = vrot.slane %v505, %v511
    %v513 = vadd.f32 %v487, %v512
    %v514 = vadd.f32 %v492, %v512
    %v515 = vmax.f32 %v513, 0.0
    %v516 = vmax.f32 %v514, 0.0
    %v517 = vsel %vm72, %v515, 0.0
    %518 = vadd.xlane.f32.xlu0 %v517
    %v519 = vpop.xlane.xlu0 %518
    %v520 = vsel %vm72, %v516, 0.0
    %521 = vadd.xlane.f32.xlu0 %v520
    %v522 = vpop.xlane.xlu0 %521
    %v523 = vrcp.pop 32.0
    %v524 = vmul.f32 %v519, %v523
    %v525 = vmul.f32 %v522, %v523
    %v526 = vsub.f32 %v515, %v524
    %v527 = vsub.f32 %v516, %v525
    %v528 = vmul.f32 %v526, %v526
    %v529 = vmul.f32 %v527, %v527
    %v530 = vsel %vm72, %v528, 0.0
    %531 = vadd.xlane.f32.xlu0 %v530
    %v532 = vpop.xlane.xlu0 %531
    %v533 = vsel %vm72, %v529, 0.0
    %534 = vadd.xlane.f32.xlu0 %v533
    %v535 = vpop.xlane.xlu0 %534
    %v536 = vmul.f32 %v532, %v523
    %v537 = vmul.f32 %v535, %v523
    %v538 = vadd.f32 %v536, 1e-05
    %v539 = vadd.f32 %v537, 1e-05
    %v540 = vrsqrt.pop %v538
    %v541 = vrsqrt.pop %v539
    %v542 = vmul.f32 %v526, %v540
    %v543 = vmul.f32 %v527, %v541
    %v544 = vlaneseq
    %v545 = vshrl.u32 %v544, 7
    %v546 = vsub.s32 0, %v545
    %v547 = vrot.slane %v507, %v546
    %v548 = vmul.f32 %v542, %v547
    %v549 = vmul.f32 %v543, %v547
    %v550 = vlaneseq
    %v551 = vshrl.u32 %v550, 7
    %v552 = vsub.s32 0, %v551
    %v553 = vrot.slane %v508, %v552
    %v554 = vadd.f32 %v548, %v553
    %v555 = vadd.f32 %v549, %v553
    %v556 = vlaneseq
    %v557 = vshrl.u32 %v556, 7
    %v558 = vsub.s32 0, %v557
    %v559 = vrot.slane %v506, %v558
    %561 = vrot.lane.b32.xlu0 %v559, 32
    %v562 = vpop.permute.xlu0 %561
    %v564 = vadd.f32 %v497, %v562
    %v565 = vadd.f32 %v502, %v562
    %v566 = vmax.f32 %v564, 0.0
    %v567 = vmax.f32 %v565, 0.0
    %570 = vrot.lane.b32.xlu0 %v566, 96
    %v571 = vpop.permute.xlu0 %570
    %572 = vrot.lane.b32.xlu0 %v567, 96
    %v573 = vpop.permute.xlu0 %572
    %v576 = vsel %vm72, %v571, 0.0
    %577 = vadd.xlane.f32.xlu0 %v576
    %v578 = vpop.xlane.xlu0 %577
    %v579 = vsel %vm72, %v573, 0.0
    %580 = vadd.xlane.f32.xlu0 %v579
    %v581 = vpop.xlane.xlu0 %580
    %v582 = vmul.f32 %v578, %v523
    %v583 = vmul.f32 %v581, %v523
    %v584 = vsub.f32 %v566, %v582
    %v585 = vsub.f32 %v567, %v583
    %v586 = vmul.f32 %v584, %v584
    %v587 = vmul.f32 %v585, %v585
    %590 = vrot.lane.b32.xlu0 %v586, 96
    %v591 = vpop.permute.xlu0 %590
    %592 = vrot.lane.b32.xlu0 %v587, 96
    %v593 = vpop.permute.xlu0 %592
    %v596 = vsel %vm72, %v591, 0.0
    %597 = vadd.xlane.f32.xlu0 %v596
    %v598 = vpop.xlane.xlu0 %597
    %v599 = vsel %vm72, %v593, 0.0
    %600 = vadd.xlane.f32.xlu0 %v599
    %v601 = vpop.xlane.xlu0 %600
    %v602 = vmul.f32 %v598, %v523
    %v603 = vmul.f32 %v601, %v523
    %v604 = vadd.f32 %v602, 1e-05
    %v605 = vadd.f32 %v603, 1e-05
    %v606 = vrsqrt.pop %v604
    %v607 = vrsqrt.pop %v605
    %v608 = vmul.f32 %v584, %v606
    %v609 = vmul.f32 %v585, %v607
    %611 = vrot.lane.b32.xlu0 %v547, 32
    %v612 = vpop.permute.xlu0 %611
    %v614 = vmul.f32 %v608, %v612
    %v615 = vmul.f32 %v609, %v612
    %617 = vrot.lane.b32.xlu0 %v553, 32
    %v618 = vpop.permute.xlu0 %617
    %v620 = vadd.f32 %v614, %v618
    %v621 = vadd.f32 %v615, %v618
    %622 = vst.msk [vmem:[#allocation8] sm:$0xff] %vm72, %v554
    %623 = vst.msk [vmem:[#allocation8 + $0x8] sm:$0xff] %vm72, %v555
    %626 = vrot.lane.b32.xlu0 %v620, 96
    %v627 = vpop.permute.xlu0 %626
    %628 = vrot.lane.b32.xlu0 %v621, 96
    %v629 = vpop.permute.xlu0 %628
    %632 = vst.msk [vmem:[#allocation9] sm:$0xff] %vm72, %v627
    %633 = vst.msk [vmem:[#allocation9 + $0x8] sm:$0xff] %vm72, %v629
    // Predicated region
    $region34: #{tpu_custom_call.1} parent=1 // pred_check
      _
    $region35: #{tpu_custom_call.1} parent=1 // pred_check_branch
      %635 = sbr.rel (0) target = $region37
    $region36: #{tpu_custom_call.1} parent=1 // pred_region
      %s637 = ssub.s32 256, 256
      %638 = vsyncadd [#allocation4], %s637
      %s639 = sshll.u32 [#allocation8], 4
      %s640 = int_to_ptr.vmem [resolvable:$true] %s639
      %645 = dma.vmem_to_hbm [thread:$0]  %s640, 256, %s5, [#allocation4], 128, 128, 8
    $region37: #{tpu_custom_call.1} parent=1 // pred_fallthru
      _
    // Predicated region
    $region38: #{tpu_custom_call.1} parent=1 // pred_check
      _
    $region39: #{tpu_custom_call.1} parent=1 // pred_check_branch
      %647 = sbr.rel (0) target = $region41
    $region40: #{tpu_custom_call.1} parent=1 // pred_region
      %s649 = ssub.s32 256, 256
      %650 = vsyncadd [#allocation10], %s649
      %s651 = sshll.u32 [#allocation9], 4
      %s652 = int_to_ptr.vmem [resolvable:$true] %s651
      %657 = dma.vmem_to_hbm [thread:$0]  %s652, 256, %s6, [#allocation10], 128, 128, 8
    $region41: #{tpu_custom_call.1} parent=1 // pred_fallthru
      _
    // Predicated region
    $region42: #{tpu_custom_call.1} parent=1 // pred_check
      _
    $region43: #{tpu_custom_call.1} parent=1 // pred_check_branch
      %659 = sbr.rel (0) target = $region45
    $region44: #{tpu_custom_call.1} parent=1 // pred_region
      %s661 = ssub.s32 256, 256
      %662 = vsyncadd [#allocation10], %s661
      %s663 = sshll.u32 [#allocation11], 4
      %s664 = int_to_ptr.vmem [resolvable:$true] %s663
      %669 = dma.vmem_to_hbm [thread:$0]  %s664, 256, %s7, [#allocation10], 128, 128, 8
    $region45: #{tpu_custom_call.1} parent=1 // pred_fallthru
      _
    // Predicated region
    $region46: #{tpu_custom_call.1} parent=1 // pred_check
      _
    $region47: #{tpu_custom_call.1} parent=1 // pred_check_branch
      %671 = sbr.rel (0) target = $region49
    $region48: #{tpu_custom_call.1} parent=1 // pred_region
      %672 = dma.done [#allocation4], 256
    $region49: #{tpu_custom_call.1} parent=1 // pred_fallthru
      _
    // Predicated region
    $region50: #{tpu_custom_call.1} parent=1 // pred_check
      _
    $region51: #{tpu_custom_call.1} parent=1 // pred_check_branch
      %674 = sbr.rel (0) target = $region53
    $region52: #{tpu_custom_call.1} parent=1 // pred_region
      %675 = dma.done [#allocation10], 256
    $region53: #{tpu_custom_call.1} parent=1 // pred_fallthru
      _
    // Predicated region
    $region54: #{tpu_custom_call.1} parent=1 // pred_check
      _
    $region55: #{tpu_custom_call.1} parent=1 // pred_check_branch
      %677 = sbr.rel (0) target = $region57
    $region56: #{tpu_custom_call.1} parent=1 // pred_region
      %678 = dma.done [#allocation10], 256
    $region57: #{tpu_custom_call.1} parent=1 // pred_fallthru
      _
    %679 = vsyncpa [#allocation3], 1
    %680 = vsyncpa [#allocation6], 1
    %681 = vsyncpa [#allocation4], 1
    %682 = vsyncpa [#allocation10], 1

</llo_original>
